<compile_context>
chip_gen: v6e
topology: v6e:2x2x1
jax: 0.10.0
libtpu: 0.0.40
codegen_flags: <defaults>
</compile_context>

<pallas_src>
import jax
import jax.numpy as jnp
from jax.experimental import pallas as pl
from jax.experimental.pallas import tpu as pltpu

EPS = 1e-5


def _round_up(x, m):
    return -(-x // m) * m


def critic_kernel(sa_ref, w_ref, vecs_ref, out_ref):
    two_b, Lw = sa_ref.shape           # (2B, Lw) merged state/action tile (f32)
    B = two_b // 2
    W = w_ref.shape[1]                 # hidden lane width (>= H1, H2), 128-mult

    x = sa_ref[0:B, :]                 # (B, Lw) state, zero-padded lanes >= S
    a = sa_ref[B:, :]                  # (B, Lw) action, zero-padded lanes >= A

    # --- unpack the single packed parameter tile (static, aligned slices) ---
    g0    = vecs_ref[0:1, :Lw]         # BN0 gamma (zero past S -> padded lanes -> 0)
    b0    = vecs_ref[1:2, :Lw]         # BN0 beta
    bias1 = vecs_ref[2:3, :]           # fc1 bias (zero past H1)
    g1    = vecs_ref[3:4, :]           # BN1 gamma (zero past H1)
    b1    = vecs_ref[4:5, :]           # BN1 beta
    bias2 = vecs_ref[5:6, :]           # fc2 bias (zero past H2)
    w3    = vecs_ref[6:7, :]           # fc3 weight row (zero past H2)
    bias3 = vecs_ref[7:8, 0:1]         # fc3 bias

    # --- unpack the single bf16 weight buffer (16-row-aligned full-lane slabs) ---
    w1  = w_ref[0:Lw, :]               # (Lw, W)  fc1.weight^T (zero pad rows/lanes)
    w2a = w_ref[Lw:Lw + W, :]          # (W,  W)  fc2.weight^T, h1 rows
    w2b = w_ref[Lw + W:, :]            # (Lw, W)  fc2.weight^T, action rows

    inv_n = 1.0 / x.shape[0]

    # --- BN0: training-mode batch stats, single reduction pass (f32) ---
    s0   = jnp.sum(x, axis=0, keepdims=True)
    ss0  = jnp.sum(x * x, axis=0, keepdims=True)
    mu0  = s0 * inv_n
    var0 = ss0 * inv_n - mu0 * mu0
    scale0 = jax.lax.rsqrt(var0 + EPS) * g0
    xhat = x * scale0 + (b0 - mu0 * scale0)

    # --- fc1 + ReLU (bf16 MXU operands, f32 accumulate) ---
    h1 = jnp.dot(xhat.astype(jnp.bfloat16), w1,
                 preferred_element_type=jnp.float32) + bias1
    h1 = jnp.maximum(h1, 0.0)

    # --- BN1: batch stats, single reduction pass (f32) ---
    s1   = jnp.sum(h1, axis=0, keepdims=True)
    ss1  = jnp.sum(h1 * h1, axis=0, keepdims=True)
    mu1  = s1 * inv_n
    var1 = ss1 * inv_n - mu1 * mu1
    scale1 = jax.lax.rsqrt(var1 + EPS) * g1
    h1n = h1 * scale1 + (b1 - mu1 * scale1)

    # --- fc2 on concat([h1n, a], dim=1) as a split matmul over the packed W2 ---
    h2 = (jnp.dot(h1n.astype(jnp.bfloat16), w2a,
                  preferred_element_type=jnp.float32)
          + jnp.dot(a.astype(jnp.bfloat16), w2b,
                    preferred_element_type=jnp.float32)
          + bias2)
    h2 = jnp.maximum(h2, 0.0)

    # --- fc3: single output -> VPU multiply + lane reduce (no MXU push) ---
    q = jnp.sum(h2 * w3, axis=1, keepdims=True) + bias3
    out_ref[...] = q.astype(out_ref.dtype)


def critic_forward(state, action, params):
    """state: (B, S) or (T, B, S); action: (B, A) or (T, B, A)."""
    squeeze = state.ndim == 2
    if squeeze:
        state, action = state[None], action[None]
    T, B, S = state.shape
    A = action.shape[-1]

    wpack = params["wpack"]
    vecs = params["vecs"]
    W = wpack.shape[1]
    Lw = (wpack.shape[0] - W) // 2

    # Merge state + action into one tile: one input DMA instead of two.
    sa = jnp.zeros((T, 2 * B, Lw), jnp.float32)
    sa = sa.at[:, :B, :S].set(state.astype(jnp.float32))
    sa = sa.at[:, B:, :A].set(action.astype(jnp.float32))

    flops = 2 * T * B * (Lw * W + W * W + Lw * W)
    bytes_accessed = (sa.size * 4 + wpack.size * 2 + vecs.size * 4 + T * B * 4)

    out = pl.pallas_call(
        critic_kernel,
        out_shape=jax.ShapeDtypeStruct((T, B, 1), jnp.float32),
        grid=(T,),
        in_specs=[
            # per-evaluation activations
            pl.BlockSpec((None, 2 * B, Lw), lambda t: (t, 0, 0)),
            # weights / packed vectors: constant block index -> DMA'd once,
            # VMEM-resident across all grid steps
            pl.BlockSpec(wpack.shape, lambda t: (0, 0)),
            pl.BlockSpec(vecs.shape, lambda t: (0, 0)),
        ],
        out_specs=pl.BlockSpec((None, B, 1), lambda t: (t, 0, 0)),
        compiler_params=pltpu.CompilerParams(
            dimension_semantics=("parallel",)),   # v7x: split T across both TCs
        cost_estimate=pl.CostEstimate(
            flops=flops,
            transcendentals=2 * T * W,            # the two rsqrt rows per eval
            bytes_accessed=bytes_accessed),
    )(sa, wpack, vecs)
    return out[0] if squeeze else out


def init_params(key, states_dim, action_dim, hidden1=128, hidden2=64, init_w=3e-4):
    """Deterministic synthetic init mirroring the PyTorch module.

    fc1.weight / fc2.weight: fanin_init -> U(-1/sqrt(size[0]), 1/sqrt(size[0]))
                             (size[0] is out_features, matching the original code)
    fc3.weight:              U(-init_w, init_w)
    biases:                  nn.Linear default U(-1/sqrt(fan_in), 1/sqrt(fan_in))
    BN gamma=1, beta=0.

    Packed layout:
      wpack (bf16, (Lw + W + Lw, W)):
        rows [0, Lw)        fc1.weight^T   (zero rows past S, lanes past H1)
        rows [Lw, Lw+W)     fc2.weight^T h1 rows  (zero lanes past H2)
        rows [Lw+W, end)    fc2.weight^T action rows (zero rows past A)
      vecs  (f32, (8, W)): g0, b0, bias1, g1, b1, bias2, fc3 row, fc3 bias.
    """
    ks = jax.random.split(key, 6)

    def unif(k, shape, bound):
        return jax.random.uniform(k, shape, jnp.float32, -bound, bound)

    Lw = _round_up(max(states_dim, action_dim), 16)   # bf16 sublane granule
    W = _round_up(max(hidden1, hidden2), 128)         # lane granule

    v1 = 1.0 / (hidden1 ** 0.5)        # fanin_init uses weight.size()[0]
    v2 = 1.0 / (hidden2 ** 0.5)

    w1 = unif(ks[0], (states_dim, hidden1), v1)                  # fc1.weight^T
    bias1 = unif(ks[1], (hidden1,), 1.0 / (states_dim ** 0.5))
    w2 = unif(ks[2], (hidden1 + action_dim, hidden2), v2)        # fc2.weight^T
    bias2 = unif(ks[3], (hidden2,), 1.0 / ((hidden1 + action_dim) ** 0.5))
    w3 = unif(ks[4], (hidden2,), init_w)                         # fc3 weight row
    bias3 = unif(ks[5], (1,), 1.0 / (hidden2 ** 0.5))

    wpack = jnp.zeros((Lw + W + Lw, W), jnp.float32)
    wpack = wpack.at[:states_dim, :hidden1].set(w1)
    wpack = wpack.at[Lw:Lw + hidden1, :hidden2].set(w2[:hidden1])
    wpack = wpack.at[Lw + W:Lw + W + action_dim, :hidden2].set(w2[hidden1:])
    wpack = wpack.astype(jnp.bfloat16)

    def row(v):
        return jnp.zeros((W,), jnp.float32).at[: v.shape[0]].set(v)

    vecs = jnp.stack(
        [
            row(jnp.ones((states_dim,), jnp.float32)),   # BN0 gamma
            row(jnp.zeros((states_dim,), jnp.float32)),  # BN0 beta
            row(bias1),                                  # fc1 bias
            row(jnp.ones((hidden1,), jnp.float32)),      # BN1 gamma
            row(jnp.zeros((hidden1,), jnp.float32)),     # BN1 beta
            row(bias2),                                  # fc2 bias
            row(w3),                                     # fc3 weight row
            row(bias3),                                  # fc3 bias (lane 0)
        ],
        axis=0,
    )

    return {
        "wpack": wpack,
        "vecs": vecs,
        "dims": (states_dim, action_dim, hidden1, hidden2, Lw, W),
    }


def critic_ref(state, action, p):
    """Pure-JAX reference (f32 math, same bf16-quantized weight values)."""
    S, A, H1, H2, Lw, W = p["dims"]
    wpack = p["wpack"].astype(jnp.float32)
    w1 = wpack[:S, :H1]
    w2a = wpack[Lw:Lw + H1, :H2]
    w2b = wpack[Lw + W:Lw + W + A, :H2]
    vecs = p["vecs"]
    g0, b0 = vecs[0, :S], vecs[1, :S]
    bias1, g1, b1 = vecs[2, :H1], vecs[3, :H1], vecs[4, :H1]
    bias2, w3, bias3 = vecs[5, :H2], vecs[6, :H2], vecs[7, 0]

    x = state
    mu0 = jnp.mean(x, axis=0, keepdims=True)
    var0 = jnp.mean((x - mu0) ** 2, axis=0, keepdims=True)
    x = (x - mu0) / jnp.sqrt(var0 + EPS) * g0 + b0

    h1 = jnp.maximum(x @ w1 + bias1, 0.0)
    mu1 = jnp.mean(h1, axis=0, keepdims=True)
    var1 = jnp.mean((h1 - mu1) ** 2, axis=0, keepdims=True)
    h1 = (h1 - mu1) / jnp.sqrt(var1 + EPS) * g1 + b1

    h2 = jnp.maximum(h1 @ w2a + action @ w2b + bias2, 0.0)
    return jnp.sum(h2 * w3, axis=1, keepdims=True) + bias3


if __name__ == "__main__":
    B, STATES_DIM, ACTION_DIM = 8, 16, 4
    HIDDEN1, HIDDEN2 = 128, 64

    key = jax.random.PRNGKey(0)
    k_state, k_action, k_param = jax.random.split(key, 3)

    state = jax.random.normal(k_state, (B, STATES_DIM), jnp.float32)
    action = jax.random.normal(k_action, (B, ACTION_DIM), jnp.float32)
    params = init_params(k_param, STATES_DIM, ACTION_DIM, HIDDEN1, HIDDEN2)

    # Single forward (matches the PyTorch module's forward).
    out = jax.block_until_ready(critic_forward(state, action, params))
    ref = critic_ref(state, action, params)
    assert out.shape == (B, 1), out.shape
    # bf16 MXU operands (f32 accumulate) -> slightly looser tolerance than pure f32.
    assert jnp.allclose(out, ref, atol=5e-3, rtol=1e-2), (out, ref)

    # Stacked evaluation (e.g. critic + target critic): one launch, grid=(T,),
    # weights DMA'd once and kept VMEM-resident, "parallel" axis for v7x.
    stateT = jnp.stack([state, state * 0.5])
    actionT = jnp.stack([action, -action])
    outT = jax.block_until_ready(critic_forward(stateT, actionT, params))
    refT = jnp.stack([critic_ref(stateT[t], actionT[t], params) for t in range(2)])
    assert outT.shape == (2, B, 1), outT.shape
    assert jnp.allclose(outT, refT, atol=5e-3, rtol=1e-2), (outT, refT)

    print("KERNEL_OK")
</pallas_src>

<mosaic_0001>
module attributes {stable_mosaic.version = 11 : i64} {
  func.func @critic_kernel(%arg0: i32, %arg1: memref<1x16x16xf32, #tpu.memory_space<vmem>>, %arg2: memref<160x128xbf16, #tpu.memory_space<vmem>>, %arg3: memref<8x128xf32, #tpu.memory_space<vmem>>, %arg4: memref<1x8x1xf32, #tpu.memory_space<vmem>>) attributes {dimension_semantics = [#tpu.dimension_semantics<parallel>], iteration_bounds = array<i64: 1>, scalar_prefetch = 0 : i64, scratch_operands = 0 : i64, tpu.core_type = #tpu.core_type<tc>, window_params = [{transform_indices = @transform_0, window_bounds = array<i64: 1, 16, 16>}, {pipeline_mode = #tpu.pipeline_mode<synchronous>, transform_indices = @transform_1, window_bounds = array<i64: 160, 128>}, {pipeline_mode = #tpu.pipeline_mode<synchronous>, transform_indices = @transform_2, window_bounds = array<i64: 8, 128>}, {transform_indices = @transform_3, window_bounds = array<i64: 1, 8, 1>}]} {
    %c0 = arith.constant 0 : index
    %c0_0 = arith.constant 0 : index
    %c0_1 = arith.constant 0 : index
    %0 = vector.load %arg1[%c0, %c0_0, %c0_1] : memref<1x16x16xf32, #tpu.memory_space<vmem>>, vector<1x8x16xf32>
    %1 = vector.shape_cast %0 : vector<1x8x16xf32> to vector<8x16xf32>
    %c0_2 = arith.constant 0 : index
    %c8 = arith.constant 8 : index
    %c0_3 = arith.constant 0 : index
    %2 = vector.load %arg1[%c0_2, %c8, %c0_3] : memref<1x16x16xf32, #tpu.memory_space<vmem>>, vector<1x8x16xf32>
    %3 = vector.shape_cast %2 : vector<1x8x16xf32> to vector<8x16xf32>
    %c0_4 = arith.constant 0 : index
    %c0_5 = arith.constant 0 : index
    %4 = vector.load %arg3[%c0_4, %c0_5] : memref<8x128xf32, #tpu.memory_space<vmem>>, vector<1x16xf32>
    %c1 = arith.constant 1 : index
    %c0_6 = arith.constant 0 : index
    %5 = vector.load %arg3[%c1, %c0_6] : memref<8x128xf32, #tpu.memory_space<vmem>>, vector<1x16xf32>
    %c2 = arith.constant 2 : index
    %c0_7 = arith.constant 0 : index
    %6 = vector.load %arg3[%c2, %c0_7] : memref<8x128xf32, #tpu.memory_space<vmem>>, vector<1x128xf32>
    %c3 = arith.constant 3 : index
    %c0_8 = arith.constant 0 : index
    %7 = vector.load %arg3[%c3, %c0_8] : memref<8x128xf32, #tpu.memory_space<vmem>>, vector<1x128xf32>
    %c4 = arith.constant 4 : index
    %c0_9 = arith.constant 0 : index
    %8 = vector.load %arg3[%c4, %c0_9] : memref<8x128xf32, #tpu.memory_space<vmem>>, vector<1x128xf32>
    %c5 = arith.constant 5 : index
    %c0_10 = arith.constant 0 : index
    %9 = vector.load %arg3[%c5, %c0_10] : memref<8x128xf32, #tpu.memory_space<vmem>>, vector<1x128xf32>
    %c6 = arith.constant 6 : index
    %c0_11 = arith.constant 0 : index
    %10 = vector.load %arg3[%c6, %c0_11] : memref<8x128xf32, #tpu.memory_space<vmem>>, vector<1x128xf32>
    %c7 = arith.constant 7 : index
    %c0_12 = arith.constant 0 : index
    %11 = vector.load %arg3[%c7, %c0_12] : memref<8x128xf32, #tpu.memory_space<vmem>>, vector<1x1xf32>
    %c0_13 = arith.constant 0 : index
    %c0_14 = arith.constant 0 : index
    %12 = vector.load %arg2[%c0_13, %c0_14] : memref<160x128xbf16, #tpu.memory_space<vmem>>, vector<16x128xbf16>
    %c16 = arith.constant 16 : index
    %c0_15 = arith.constant 0 : index
    %13 = vector.load %arg2[%c16, %c0_15] : memref<160x128xbf16, #tpu.memory_space<vmem>>, vector<128x128xbf16>
    %c144 = arith.constant 144 : index
    %c0_16 = arith.constant 0 : index
    %14 = vector.load %arg2[%c144, %c0_16] : memref<160x128xbf16, #tpu.memory_space<vmem>>, vector<16x128xbf16>
    %cst = arith.constant dense<0.000000e+00> : vector<16xf32>
    %15 = vector.multi_reduction <add>, %1, %cst [0] : vector<8x16xf32> to vector<16xf32>
    %16 = vector.shape_cast %15 : vector<16xf32> to vector<1x16xf32>
    %17 = arith.mulf %1, %1 : vector<8x16xf32>
    %cst_17 = arith.constant dense<0.000000e+00> : vector<16xf32>
    %18 = vector.multi_reduction <add>, %17, %cst_17 [0] : vector<8x16xf32> to vector<16xf32>
    %19 = vector.shape_cast %18 : vector<16xf32> to vector<1x16xf32>
    %cst_18 = arith.constant 1.250000e-01 : f32
    %20 = vector.broadcast %cst_18 : f32 to vector<1x16xf32>
    %21 = arith.mulf %16, %20 : vector<1x16xf32>
    %cst_19 = arith.constant 1.250000e-01 : f32
    %22 = vector.broadcast %cst_19 : f32 to vector<1x16xf32>
    %23 = arith.mulf %19, %22 : vector<1x16xf32>
    %24 = arith.mulf %21, %21 : vector<1x16xf32>
    %25 = arith.subf %23, %24 : vector<1x16xf32>
    %cst_20 = arith.constant 9.99999974E-6 : f32
    %26 = vector.broadcast %cst_20 : f32 to vector<1x16xf32>
    %27 = arith.addf %25, %26 : vector<1x16xf32>
    %28 = math.rsqrt %27 : vector<1x16xf32>
    %29 = arith.mulf %28, %4 : vector<1x16xf32>
    %30 = vector.broadcast %29 : vector<1x16xf32> to vector<8x16xf32>
    %31 = arith.mulf %1, %30 : vector<8x16xf32>
    %32 = arith.mulf %21, %29 : vector<1x16xf32>
    %33 = arith.subf %5, %32 : vector<1x16xf32>
    %34 = vector.broadcast %33 : vector<1x16xf32> to vector<8x16xf32>
    %35 = arith.addf %31, %34 : vector<8x16xf32>
    %36 = arith.truncf %35 : vector<8x16xf32> to vector<8x16xbf16>
    %cst_21 = arith.constant dense<0.000000e+00> : vector<8x128xf32>
    %37 = tpu.matmul %36, %12, %cst_21 {dimension_numbers = #tpu.dot_dimension_numbers<[1], [0], [0], [1], [0, 0, 1, 1], [], []>} : vector<8x16xbf16>, vector<16x128xbf16>, vector<8x128xf32> -> vector<8x128xf32>
    %38 = vector.broadcast %6 : vector<1x128xf32> to vector<8x128xf32>
    %39 = arith.addf %37, %38 : vector<8x128xf32>
    %cst_22 = arith.constant 0.000000e+00 : f32
    %40 = vector.broadcast %cst_22 : f32 to vector<8x128xf32>
    %41 = arith.maximumf %39, %40 : vector<8x128xf32>
    %cst_23 = arith.constant dense<0.000000e+00> : vector<128xf32>
    %42 = vector.multi_reduction <add>, %41, %cst_23 [0] : vector<8x128xf32> to vector<128xf32>
    %43 = vector.shape_cast %42 : vector<128xf32> to vector<1x128xf32>
    %44 = arith.mulf %41, %41 : vector<8x128xf32>
    %cst_24 = arith.constant dense<0.000000e+00> : vector<128xf32>
    %45 = vector.multi_reduction <add>, %44, %cst_24 [0] : vector<8x128xf32> to vector<128xf32>
    %46 = vector.shape_cast %45 : vector<128xf32> to vector<1x128xf32>
    %cst_25 = arith.constant 1.250000e-01 : f32
    %47 = vector.broadcast %cst_25 : f32 to vector<1x128xf32>
    %48 = arith.mulf %43, %47 : vector<1x128xf32>
    %cst_26 = arith.constant 1.250000e-01 : f32
    %49 = vector.broadcast %cst_26 : f32 to vector<1x128xf32>
    %50 = arith.mulf %46, %49 : vector<1x128xf32>
    %51 = arith.mulf %48, %48 : vector<1x128xf32>
    %52 = arith.subf %50, %51 : vector<1x128xf32>
    %cst_27 = arith.constant 9.99999974E-6 : f32
    %53 = vector.broadcast %cst_27 : f32 to vector<1x128xf32>
    %54 = arith.addf %52, %53 : vector<1x128xf32>
    %55 = math.rsqrt %54 : vector<1x128xf32>
    %56 = arith.mulf %55, %7 : vector<1x128xf32>
    %57 = vector.broadcast %56 : vector<1x128xf32> to vector<8x128xf32>
    %58 = arith.mulf %41, %57 : vector<8x128xf32>
    %59 = arith.mulf %48, %56 : vector<1x128xf32>
    %60 = arith.subf %8, %59 : vector<1x128xf32>
    %61 = vector.broadcast %60 : vector<1x128xf32> to vector<8x128xf32>
    %62 = arith.addf %58, %61 : vector<8x128xf32>
    %63 = arith.truncf %62 : vector<8x128xf32> to vector<8x128xbf16>
    %cst_28 = arith.constant dense<0.000000e+00> : vector<8x128xf32>
    %64 = tpu.matmul %63, %13, %cst_28 {dimension_numbers = #tpu.dot_dimension_numbers<[1], [0], [0], [1], [0, 0, 1, 1], [], []>} : vector<8x128xbf16>, vector<128x128xbf16>, vector<8x128xf32> -> vector<8x128xf32>
    %65 = arith.truncf %3 : vector<8x16xf32> to vector<8x16xbf16>
    %cst_29 = arith.constant dense<0.000000e+00> : vector<8x128xf32>
    %66 = tpu.matmul %65, %14, %cst_29 {dimension_numbers = #tpu.dot_dimension_numbers<[1], [0], [0], [1], [0, 0, 1, 1], [], []>} : vector<8x16xbf16>, vector<16x128xbf16>, vector<8x128xf32> -> vector<8x128xf32>
    %67 = arith.addf %64, %66 : vector<8x128xf32>
    %68 = vector.broadcast %9 : vector<1x128xf32> to vector<8x128xf32>
    %69 = arith.addf %67, %68 : vector<8x128xf32>
    %cst_30 = arith.constant 0.000000e+00 : f32
    %70 = vector.broadcast %cst_30 : f32 to vector<8x128xf32>
    %71 = arith.maximumf %69, %70 : vector<8x128xf32>
    %72 = vector.broadcast %10 : vector<1x128xf32> to vector<8x128xf32>
    %73 = arith.mulf %71, %72 : vector<8x128xf32>
    %cst_31 = arith.constant dense<0.000000e+00> : vector<8xf32>
    %74 = vector.multi_reduction <add>, %73, %cst_31 [1] : vector<8x128xf32> to vector<8xf32>
    %75 = vector.shape_cast %74 : vector<8xf32> to vector<8x1xf32>
    %76 = vector.broadcast %11 : vector<1x1xf32> to vector<8x1xf32>
    %77 = arith.addf %75, %76 : vector<8x1xf32>
    %c0_32 = arith.constant 0 : index
    %c0_33 = arith.constant 0 : index
    %c0_34 = arith.constant 0 : index
    %78 = vector.load %arg4[%c0_32, %c0_33, %c0_34] : memref<1x8x1xf32, #tpu.memory_space<vmem>>, vector<1x8x1xf32>
    %79 = vector.shape_cast %78 : vector<1x8x1xf32> to vector<8x1xf32>
    %80 = vector.shape_cast %77 : vector<8x1xf32> to vector<1x8x1xf32>
    tpu.vector_store %arg4[%c0_32, %c0_33, %c0_34], %80 {strides = array<i32>} : memref<1x8x1xf32, #tpu.memory_space<vmem>>, vector<1x8x1xf32>,
    return
  }
  func.func @transform_0(%arg0: i32) -> (i32, i32, i32) {
    %c0_i32 = arith.constant 0 : i32
    %c0_i32_0 = arith.constant 0 : i32
    %c0_i32_1 = arith.constant 0 : i32
    return %arg0, %c0_i32, %c0_i32_0 : i32, i32, i32
  }
  func.func @transform_1(%arg0: i32) -> (i32, i32) {
    %c0_i32 = arith.constant 0 : i32
    %c0_i32_0 = arith.constant 0 : i32
    %c0_i32_1 = arith.constant 0 : i32
    return %c0_i32, %c0_i32_0 : i32, i32
  }
  func.func @transform_2(%arg0: i32) -> (i32, i32) {
    %c0_i32 = arith.constant 0 : i32
    %c0_i32_0 = arith.constant 0 : i32
    %c0_i32_1 = arith.constant 0 : i32
    return %c0_i32, %c0_i32_0 : i32, i32
  }
  func.func @transform_3(%arg0: i32) -> (i32, i32, i32) {
    %c0_i32 = arith.constant 0 : i32
    %c0_i32_0 = arith.constant 0 : i32
    %c0_i32_1 = arith.constant 0 : i32
    return %arg0, %c0_i32, %c0_i32_0 : i32, i32, i32
  }
}

</mosaic_0001>

<llo_original>
// kernel: tpu_custom_call.1
$region0: #{tpu_custom_call.1}
  #allocation0 [shape = 'u32[]', space=smem, size = 0x4, offset = 0x4, fixed_abs, tag = 'smem constant byte address 0x4 - core index']
  #allocation1 [shape = 'u32[144,128]{1,0:T(1,128)}', space=vmem, size = 0x12000, scoped, tag = 'internal scratch']
  %s0 = inlined_call_operand.hbm [shape: f32[1,16,16], index: 0, kind: input, shape index: {}]
  %s1 = inlined_call_operand.hbm [shape: bf16[160,128], index: 1, kind: input, shape index: {}]
  %s2 = inlined_call_operand.hbm [shape: f32[8,128], index: 2, kind: input, shape index: {}]
  %s3 = inlined_call_operand.vmem [shape: f32[1,8,1], index: 3, kind: output, shape index: {}]
  %s4 = sld [smem:[#allocation0]]
  $region34: #{tpu_custom_call.1} parent=0
    _
  %s6 = ssub.s32 1, %s4
  %s7 = scalar_select 0, %s6, %s4
  $region1: #{tpu_custom_call.1} parent=0
    #allocation2 [shape = 'u8[8192]{0}', space=vmem, size = 0x2000, scoped, tag = 'input window, operand 0, single buffered']
    #allocation3 [shape = 's32[1]{0}', space=sflag, size = 0x4, scoped, tag = 'scoped memory for tpu_custom_call.1']
    #allocation4 [shape = 'u8[40960]{0}', space=vmem, size = 0xa000, scoped, tag = 'input window, operand 1, single buffered']
    #allocation5 [shape = 's32[1]{0}', space=sflag, size = 0x4, scoped, tag = 'scoped memory for tpu_custom_call.1']
    #allocation6 [shape = 'u8[4096]{0}', space=vmem, size = 0x1000, scoped, tag = 'input window, operand 2, single buffered']
    %8 = vsyncpa [#allocation3], 0
    %9 = vsyncpa [#allocation5], 0
    // Predicated region
    $region2: #{tpu_custom_call.1} parent=1 // pred_check
      _
    $region3: #{tpu_custom_call.1} parent=1 // pred_check_branch
      %11 = sbr.rel (0) target = $region5
    $region4: #{tpu_custom_call.1} parent=1 // pred_region
      %s13 = ssub.s32 256, 256
      %14 = vsyncadd [#allocation3], %s13
      %s15 = sshll.u32 [#allocation2], 4
      %s16 = int_to_ptr.vmem [resolvable:$true] %s15
      %21 = dma.hbm_to_vmem [thread:$0]  %s0, 256, %s16, [#allocation3], 128, 128, 8
    $region5: #{tpu_custom_call.1} parent=1 // pred_fallthru
      _
    // Predicated region
    $region6: #{tpu_custom_call.1} parent=1 // pred_check
      _
    $region7: #{tpu_custom_call.1} parent=1 // pred_check_branch
      %23 = sbr.rel (0) target = $region9
    $region8: #{tpu_custom_call.1} parent=1 // pred_region
      %s25 = ssub.s32 1280, 1280
      %26 = vsyncadd [#allocation5], %s25
      %s27 = sshll.u32 [#allocation4], 4
      %s28 = int_to_ptr.vmem [resolvable:$true] %s27
      %33 = dma.hbm_to_vmem [thread:$0]  %s1, 1280, %s28, [#allocation5], 64, 64, 4
    $region9: #{tpu_custom_call.1} parent=1 // pred_fallthru
      _
    // Predicated region
    $region10: #{tpu_custom_call.1} parent=1 // pred_check
      _
    $region11: #{tpu_custom_call.1} parent=1 // pred_check_branch
      %35 = sbr.rel (0) target = $region13
    $region12: #{tpu_custom_call.1} parent=1 // pred_region
      %s37 = ssub.s32 128, 128
      %38 = vsyncadd [#allocation5], %s37
      %s40 = sshll.u32 [#allocation6], 4
      %s41 = int_to_ptr.vmem [resolvable:$true] %s40
      %43 = dma.hbm_to_vmem [thread:$0]  %s2, 128, %s41, [#allocation5]
    $region13: #{tpu_custom_call.1} parent=1 // pred_fallthru
      _
    // Predicated region
    $region14: #{tpu_custom_call.1} parent=1 // pred_check
      _
    $region15: #{tpu_custom_call.1} parent=1 // pred_check_branch
      %45 = sbr.rel (0) target = $region17
    $region16: #{tpu_custom_call.1} parent=1 // pred_region
      %46 = dma.done [#allocation3], 256
    $region17: #{tpu_custom_call.1} parent=1 // pred_fallthru
      _
    // Predicated region
    $region18: #{tpu_custom_call.1} parent=1 // pred_check
      _
    $region19: #{tpu_custom_call.1} parent=1 // pred_check_branch
      %48 = sbr.rel (0) target = $region21
    $region20: #{tpu_custom_call.1} parent=1 // pred_region
      %49 = dma.done [#allocation5], 1280
    $region21: #{tpu_custom_call.1} parent=1 // pred_fallthru
      _
    // Predicated region
    $region22: #{tpu_custom_call.1} parent=1 // pred_check
      _
    $region23: #{tpu_custom_call.1} parent=1 // pred_check_branch
      %51 = sbr.rel (0) target = $region25
    $region24: #{tpu_custom_call.1} parent=1 // pred_region
      %52 = dma.done [#allocation5], 128
    $region25: #{tpu_custom_call.1} parent=1 // pred_fallthru
      _
    %v54 = vld [vmem:[#allocation2] sm:$0xff]
    %v55 = vld [vmem:[#allocation2 + $0x8] sm:$0xff]
    %v56 = vld [vmem:[#allocation6] sm:$0x1]
    %v57 = vld [vmem:[#allocation6 + $0x1] sm:$0x1]
    %v58 = vld [vmem:[#allocation6 + $0x2] sm:$0x1]
    %v59 = vld [vmem:[#allocation6 + $0x3] sm:$0x1]
    %v60 = vld [vmem:[#allocation6 + $0x4] sm:$0x1]
    %v61 = vld [vmem:[#allocation6 + $0x5] sm:$0x1]
    %v62 = vld [vmem:[#allocation6 + $0x6] sm:$0x1]
    %v63 = vld [vmem:[#allocation6 + $0x7] sm:$0x1]
    %v64 = vld [vmem:[#allocation4] sm:$0xf]
    %v65 = vld [vmem:[#allocation4 + $0x4] sm:$0xf]
    %v66 = vld [vmem:[#allocation4 + $0x8] sm:$0xf]
    %v67 = vld [vmem:[#allocation4 + $0xc] sm:$0xf]
    %v68 = vld [vmem:[#allocation4 + $0x10] sm:$0xf]
    %v69 = vld [vmem:[#allocation4 + $0x14] sm:$0xf]
    %v70 = vld [vmem:[#allocation4 + $0x18] sm:$0xf]
    %v71 = vld [vmem:[#allocation4 + $0x1c] sm:$0xf]
    %v72 = vld [vmem:[#allocation4 + $0x20] sm:$0xf]
    %v73 = vld [vmem:[#allocation4 + $0x24] sm:$0xf]
    %v74 = vld [vmem:[#allocation4 + $0x28] sm:$0xf]
    %v75 = vld [vmem:[#allocation4 + $0x2c] sm:$0xf]
    %v76 = vld [vmem:[#allocation4 + $0x30] sm:$0xf]
    %v77 = vld [vmem:[#allocation4 + $0x34] sm:$0xf]
    %v78 = vld [vmem:[#allocation4 + $0x38] sm:$0xf]
    %v79 = vld [vmem:[#allocation4 + $0x3c] sm:$0xf]
    %v80 = vld [vmem:[#allocation4 + $0x40] sm:$0xf]
    %v81 = vld [vmem:[#allocation4 + $0x44] sm:$0xf]
    %v82 = vld [vmem:[#allocation4 + $0x48] sm:$0xf]
    %v83 = vld [vmem:[#allocation4 + $0x4c] sm:$0xf]
    %vm84 = vcmask 130048
    %v85 = vsel %vm84, %v54, 0.0
    %v86 = vrot.slane %v85, 4
    %v87 = vadd.f32 %v85, %v86
    %v88 = vrot.slane %v87, 2
    %v89 = vadd.f32 %v87, %v88
    %v90 = vrot.slane %v89, 1
    %v91 = vadd.f32 %v89, %v90
    %v92 = vmul.f32 %v54, %v54
    %v93 = vsel %vm84, %v92, 0.0
    %v94 = vrot.slane %v93, 4
    %v95 = vadd.f32 %v93, %v94
    %v96 = vrot.slane %v95, 2
    %v97 = vadd.f32 %v95, %v96
    %v98 = vrot.slane %v97, 1
    %v99 = vadd.f32 %v97, %v98
    %v100 = vmul.f32 %v91, 0.125
    %v101 = vmul.f32 %v99, 0.125
    %v102 = vmul.f32 %v100, %v100
    %v103 = vsub.f32 %v101, %v102
    %v104 = vadd.f32 %v103, 1e-05
    %v105 = vrsqrt.pop %v104
    %v106 = vmul.f32 %v105, %v56
    %v107 = vlaneseq
    %v108 = vshrl.u32 %v107, 7
    %v109 = vsub.s32 0, %v108
    %v110 = vrot.slane %v106, %v109
    %v111 = vmul.f32 %v54, %v110
    %v112 = vmul.f32 %v100, %v106
    %v113 = vsub.f32 %v57, %v112
    %v114 = vlaneseq
    %v115 = vshrl.u32 %v114, 7
    %v116 = vsub.s32 0, %v115
    %v117 = vrot.slane %v113, %v116
    %v118 = vadd.f32 %v111, %v117
    %v119 = vpack.c.bf16 %v118, %v118
    %v120 = vlaneseq
    %v121 = vshrl.u32 %v120, 7
    %v122 = vsub.s32 0, %v121
    %v123 = vrot.slane %v58, %v122
    %v126 = vunpack.c.l.b16 %v64
    %v127 = vunpack.c.l.b16 %v65
    %v128 = vpack.c.b16 %v127, %v126
    %v131 = vsel %vm84, %v119, 0
    %133 = vmatprep.subr.bf16.mxu0 0
    %134 = vmatpush1.bf16.msra.mxu0 0
    %135 = vmatprep.subr.bf16.mxu0 0
    %136 = vmatpush1.bf16.msra.mxu0 0
    %137 = vmatprep.subr.bf16.mxu0 0
    %138 = vmatpush1.bf16.msra.mxu0 0
    %139 = vmatprep.subr.bf16.mxu0 0
    %140 = vmatpush1.bf16.msra.mxu0 0
    %141 = vmatprep.subr.bf16.mxu0 0
    %142 = vmatpush1.bf16.msra.mxu0 0
    %143 = vmatprep.subr.bf16.mxu0 0
    %144 = vmatpush1.bf16.msra.mxu0 0
    %145 = vmatprep.subr.bf16.mxu0 0
    %146 = vmatpush1.bf16.msra.mxu0 0
    %147 = vmatprep.subr.bf16.mxu0 0
    %148 = vmatpush1.bf16.msra.mxu0 %v128
    %149 = vmatprep.subr.bf16.mxu0 0
    %150 = vmatpush2.bf16.msra.mxu0 0
    %151 = vmatprep.subr.bf16.mxu0 0
    %152 = vmatpush2.bf16.msra.mxu0 0
    %153 = vmatprep.subr.bf16.mxu0 0
    %154 = vmatpush2.bf16.msra.mxu0 0
    %155 = vmatprep.subr.bf16.mxu0 0
    %156 = vmatpush2.bf16.msra.mxu0 0
    %157 = vmatprep.subr.bf16.mxu0 0
    %158 = vmatpush2.bf16.msra.mxu0 0
    %159 = vmatprep.subr.bf16.mxu0 0
    %160 = vmatpush2.bf16.msra.mxu0 0
    %161 = vmatprep.subr.bf16.mxu0 0
    %162 = vmatpush2.bf16.msra.mxu0 0
    %163 = vmatprep.subr.bf16.mxu0 0
    %164 = vmatpush2.bf16.msra.mxu0 0
    %165 = vmatprep.mubr.bf16.mxu0 0
    %166 = vmatmul.mubr.bf16.gmra.mxu0 %v131
    %v167 = vpop.f32.mrf.mxu0
    %v168 = vadd.f32 %v123, %v167
    %v169 = vpop.f32.mrf.mxu0
    %v170 = vpop.f32.mrf.mxu0
    %v171 = vpop.f32.mrf.mxu0
    %172 = vdwg.mxu0
    %v173 = vmax.f32 %v168, 0.0
    %v174 = vrot.slane %v173, 4
    %v175 = vadd.f32 %v173, %v174
    %v176 = vrot.slane %v175, 2
    %v177 = vadd.f32 %v175, %v176
    %v178 = vrot.slane %v177, 1
    %v179 = vadd.f32 %v177, %v178
    %v180 = vmul.f32 %v173, %v173
    %v181 = vrot.slane %v180, 4
    %v182 = vadd.f32 %v180, %v181
    %v183 = vrot.slane %v182, 2
    %v184 = vadd.f32 %v182, %v183
    %v185 = vrot.slane %v184, 1
    %v186 = vadd.f32 %v184, %v185
    %v187 = vmul.f32 %v179, 0.125
    %v188 = vmul.f32 %v186, 0.125
    %v189 = vmul.f32 %v187, %v187
    %v190 = vsub.f32 %v188, %v189
    %v191 = vadd.f32 %v190, 1e-05
    %v192 = vrsqrt.pop %v191
    %v193 = vmul.f32 %v192, %v59
    %v194 = vlaneseq
    %v195 = vshrl.u32 %v194, 7
    %v196 = vsub.s32 0, %v195
    %v197 = vrot.slane %v193, %v196
    %v198 = vmul.f32 %v173, %v197
    %v199 = vmul.f32 %v187, %v193
    %v200 = vsub.f32 %v60, %v199
    %v201 = vlaneseq
    %v202 = vshrl.u32 %v201, 7
    %v203 = vsub.s32 0, %v202
    %v204 = vrot.slane %v200, %v203
    %v205 = vadd.f32 %v198, %v204
    %v206 = vpack.c.bf16 %v205, %v205
    %v207 = vpack.c.bf16 %v55, %v55
    %v210 = vunpack.c.l.b16 %v82
    %v211 = vunpack.c.l.b16 %v83
    %v212 = vpack.c.b16 %v211, %v210
    %v215 = vsel %vm84, %v207, 0
    %217 = vmatprep.subr.bf16.mxu0 0
    %218 = vmatpush1.bf16.msra.mxu0 0
    %219 = vmatprep.subr.bf16.mxu0 0
    %220 = vmatpush1.bf16.msra.mxu0 0
    %221 = vmatprep.subr.bf16.mxu0 0
    %222 = vmatpush1.bf16.msra.mxu0 0
    %223 = vmatprep.subr.bf16.mxu0 0
    %224 = vmatpush1.bf16.msra.mxu0 0
    %225 = vmatprep.subr.bf16.mxu0 0
    %226 = vmatpush1.bf16.msra.mxu0 0
    %227 = vmatprep.subr.bf16.mxu0 0
    %228 = vmatpush1.bf16.msra.mxu0 0
    %229 = vmatprep.subr.bf16.mxu0 0
    %230 = vmatpush1.bf16.msra.mxu0 0
    %231 = vmatprep.subr.bf16.mxu0 0
    %232 = vmatpush1.bf16.msra.mxu0 %v212
    %233 = vmatprep.subr.bf16.mxu0 0
    %234 = vmatpush2.bf16.msra.mxu0 0
    %235 = vmatprep.subr.bf16.mxu0 0
    %236 = vmatpush2.bf16.msra.mxu0 0
    %237 = vmatprep.subr.bf16.mxu0 0
    %238 = vmatpush2.bf16.msra.mxu0 0
    %239 = vmatprep.subr.bf16.mxu0 0
    %240 = vmatpush2.bf16.msra.mxu0 0
    %241 = vmatprep.subr.bf16.mxu0 0
    %242 = vmatpush2.bf16.msra.mxu0 0
    %243 = vmatprep.subr.bf16.mxu0 0
    %244 = vmatpush2.bf16.msra.mxu0 0
    %245 = vmatprep.subr.bf16.mxu0 0
    %246 = vmatpush2.bf16.msra.mxu0 0
    %247 = vmatprep.subr.bf16.mxu0 0
    %248 = vmatpush2.bf16.msra.mxu0 0
    %249 = vmatprep.mubr.bf16.mxu0 0
    %250 = vmatmul.mubr.bf16.gmra.mxu0 %v215
    %v251 = vpop.f32.mrf.mxu0
    %v252 = vadd.f32 0.0, %v251
    %v253 = vpop.f32.mrf.mxu0
    %v254 = vpop.f32.mrf.mxu0
    %v255 = vpop.f32.mrf.mxu0
    %256 = vdwg.mxu0
    %v273 = vunpack.c.l.b16 %v66
    %v274 = vunpack.c.l.b16 %v67
    %v275 = vunpack.c.l.b16 %v68
    %v276 = vunpack.c.l.b16 %v69
    %v277 = vunpack.c.l.b16 %v70
    %v278 = vunpack.c.l.b16 %v71
    %v279 = vunpack.c.l.b16 %v72
    %v280 = vunpack.c.l.b16 %v73
    %v281 = vunpack.c.l.b16 %v74
    %v282 = vunpack.c.l.b16 %v75
    %v283 = vunpack.c.l.b16 %v76
    %v284 = vunpack.c.l.b16 %v77
    %v285 = vunpack.c.l.b16 %v78
    %v286 = vunpack.c.l.b16 %v79
    %v287 = vunpack.c.l.b16 %v80
    %v288 = vunpack.c.l.b16 %v81
    %v289 = vpack.c.b16 %v274, %v273
    %v290 = vpack.c.b16 %v276, %v275
    %v291 = vpack.c.b16 %v278, %v277
    %v292 = vpack.c.b16 %v280, %v279
    %v293 = vpack.c.b16 %v282, %v281
    %v294 = vpack.c.b16 %v284, %v283
    %v295 = vpack.c.b16 %v286, %v285
    %v296 = vpack.c.b16 %v288, %v287
    %305 = vmatprep.subr.bf16.mxu0 0
    %306 = vmatpush1.bf16.msra.mxu0 %v296
    %307 = vmatprep.subr.bf16.mxu0 0
    %308 = vmatpush1.bf16.msra.mxu0 %v295
    %309 = vmatprep.subr.bf16.mxu0 0
    %310 = vmatpush1.bf16.msra.mxu0 %v294
    %311 = vmatprep.subr.bf16.mxu0 0
    %312 = vmatpush1.bf16.msra.mxu0 %v293
    %313 = vmatprep.subr.bf16.mxu0 0
    %314 = vmatpush1.bf16.msra.mxu0 %v292
    %315 = vmatprep.subr.bf16.mxu0 0
    %316 = vmatpush1.bf16.msra.mxu0 %v291
    %317 = vmatprep.subr.bf16.mxu0 0
    %318 = vmatpush1.bf16.msra.mxu0 %v290
    %319 = vmatprep.subr.bf16.mxu0 0
    %320 = vmatpush1.bf16.msra.mxu0 %v289
    %321 = vmatprep.subr.bf16.mxu0 0
    %322 = vmatpush2.bf16.msra.mxu0 0
    %323 = vmatprep.subr.bf16.mxu0 0
    %324 = vmatpush2.bf16.msra.mxu0 0
    %325 = vmatprep.subr.bf16.mxu0 0
    %326 = vmatpush2.bf16.msra.mxu0 0
    %327 = vmatprep.subr.bf16.mxu0 0
    %328 = vmatpush2.bf16.msra.mxu0 0
    %329 = vmatprep.subr.bf16.mxu0 0
    %330 = vmatpush2.bf16.msra.mxu0 0
    %331 = vmatprep.subr.bf16.mxu0 0
    %332 = vmatpush2.bf16.msra.mxu0 0
    %333 = vmatprep.subr.bf16.mxu0 0
    %334 = vmatpush2.bf16.msra.mxu0 0
    %335 = vmatprep.subr.bf16.mxu0 0
    %336 = vmatpush2.bf16.msra.mxu0 0
    %337 = vmatprep.mubr.bf16.mxu0 0
    %338 = vmatmul.mubr.bf16.gmra.mxu0 %v206
    %v339 = vpop.f32.mrf.mxu0
    %v340 = vadd.f32 %v252, %v339
    %v341 = vpop.f32.mrf.mxu0
    %v342 = vpop.f32.mrf.mxu0
    %v343 = vpop.f32.mrf.mxu0
    %344 = vdwg.mxu0
    %v345 = vlaneseq
    %v346 = vshrl.u32 %v345, 7
    %v347 = vsub.s32 0, %v346
    %v348 = vrot.slane %v61, %v347
    %v349 = vadd.f32 %v340, %v348
    %v350 = vmax.f32 %v349, 0.0
    %v351 = vlaneseq
    %v352 = vshrl.u32 %v351, 7
    %v353 = vsub.s32 0, %v352
    %v354 = vrot.slane %v62, %v353
    %v355 = vmul.f32 %v350, %v354
    %356 = vadd.xlane.f32.xlu0 %v355
    %v357 = vpop.xlane.xlu0 %356
    %v358 = vlaneseq
    %v359 = vshrl.u32 %v358, 7
    %v360 = vsub.s32 0, %v359
    %v361 = vrot.slane %v63, %v360
    %v362 = vadd.f32 %v357, %v361
    %vm363 = vcmask 7168
    %364 = vst.msk [vmem:[%s3] sm:$0xff] %vm363, %v362
    // Predicated region
    $region26: #{tpu_custom_call.1} parent=1 // pred_check
      _
    $region27: #{tpu_custom_call.1} parent=1 // pred_check_branch
      %366 = sbr.rel (0) target = $region29
    $region28: #{tpu_custom_call.1} parent=1 // pred_region
      _
    $region29: #{tpu_custom_call.1} parent=1 // pred_fallthru
      _
    // Predicated region
    $region30: #{tpu_custom_call.1} parent=1 // pred_check
      _
    $region31: #{tpu_custom_call.1} parent=1 // pred_check_branch
      %368 = sbr.rel (0) target = $region33
    $region32: #{tpu_custom_call.1} parent=1 // pred_region
      _
    $region33: #{tpu_custom_call.1} parent=1 // pred_fallthru
      _
    %369 = vsyncpa [#allocation3], 1
    %370 = vsyncpa [#allocation5], 1

</llo_original>
